<compile_context>
chip_gen: v5e
topology: v5e:2x2
jax: 0.10.0
libtpu: 0.0.40
codegen_flags: <defaults>
</compile_context>

<pallas_src>
import jax
import jax.numpy as jnp
from jax.experimental import pallas as pl
from jax.experimental.pallas import tpu as pltpu

_LANES = 128
_SUBLANES = 8


# ---------------------------------------------------------------------------
# Kernel (shared by folded and wide paths, with or without bias)
# ---------------------------------------------------------------------------
def _phase_cos_kernel(t_ref, w_ref, o_ref):
    # phase = t_aug @ w_aug on the MXU (f32-accurate multi-pass), cos on the VPU.
    phase = jnp.dot(t_ref[...], w_ref[...],
                    preferred_element_type=jnp.float32,
                    precision=jax.lax.Precision.HIGHEST)
    o_ref[...] = jnp.cos(phase).astype(o_ref.dtype)


# ---------------------------------------------------------------------------
# Helpers
# ---------------------------------------------------------------------------
def _prepare_input(t):
    """Mirror of BaseTimeEncoding._prepare_input: float cast + unsqueeze(1)."""
    t = t.astype(jnp.float32)
    if t.ndim == 1:
        t = t[:, None]
    return t


def _round_up(x, m):
    return (x + m - 1) // m * m


def _pick_block_rows(r_total, block_cols, total_cols, out_bytes, max_block_elems):
    """Row-block size: as large as the element budget allows, >=2 blocks when
    there is enough work (megacore), never more than the sublane-padded rows."""
    br = max(_SUBLANES, (max_block_elems // block_cols) // _SUBLANES * _SUBLANES)
    if r_total * total_cols * out_bytes > (2 << 20) and r_total > 2 * _SUBLANES:
        br = min(br, _round_up(-(-r_total // 2), _SUBLANES))
    return min(br, _round_up(r_total, _SUBLANES))


def _vmem_limit(br, block_cols, k, out_bytes):
    need = 2 * (br * block_cols * out_bytes + br * k * 4 + k * block_cols * 4)
    return int(max(need + (4 << 20), 32 << 20))


def _cost(rows, cols, k, out_bytes):
    return pl.CostEstimate(
        flops=int(2 * rows * cols * k),
        transcendentals=int(rows * cols),
        bytes_accessed=int(rows * cols * out_bytes + rows * k * 4 + k * cols * 4),
    )


# ---------------------------------------------------------------------------
# D < 128 (and 128 % D == 0): fold `fold = 128 // D` time entries per 128-lane row
# ---------------------------------------------------------------------------
def _encode_folded(t, w, b, n, d, fold, max_block_elems, out_dtype):
    c = fold * d                                   # == 128 lanes
    out_bytes = jnp.dtype(out_dtype).itemsize
    r_needed = -(-n // fold)                       # ceil(n / fold)
    rows = _round_up(r_needed, _SUBLANES)          # pad only to a sublane multiple
    n_pad = rows * fold
    if n_pad != n:
        t = jnp.concatenate([t, jnp.zeros((n_pad - n, 1), jnp.float32)], axis=0)
    t_folded = t.reshape(rows, fold)               # free row-major reshape

    # Block-diagonal basis: wm[j, j*d + k] = w[k], zeros elsewhere.
    eye = jnp.eye(fold, dtype=jnp.float32)
    wm = (eye[:, :, None] * w.reshape(1, 1, d)).reshape(fold, c)
    if b is not None:
        # Fold the bias into the matmul: ones column x tiled-bias row.
        t_folded = jnp.concatenate(
            [t_folded, jnp.ones((rows, 1), jnp.float32)], axis=1)
        wm = jnp.concatenate([wm, jnp.tile(b, (1, fold))], axis=0)
    k = wm.shape[0]

    br = _pick_block_rows(rows, c, c, out_bytes, max_block_elems)

    out_folded = pl.pallas_call(
        _phase_cos_kernel,
        out_shape=jax.ShapeDtypeStruct((rows, c), out_dtype),
        grid=(pl.cdiv(rows, br),),
        in_specs=[pl.BlockSpec((br, k), lambda i: (i, 0)),
                  pl.BlockSpec((k, c), lambda i: (0, 0))],   # resident basis
        out_specs=pl.BlockSpec((br, c), lambda i: (i, 0)),
        compiler_params=pltpu.CompilerParams(
            dimension_semantics=("parallel",),
            vmem_limit_bytes=_vmem_limit(br, c, k, out_bytes)),
        cost_estimate=_cost(rows, c, k, out_bytes),
    )(t_folded, wm)

    out = out_folded.reshape(rows * fold, d)       # free row-major reshape
    # Slice only when N % fold != 0 / N not sublane-aligned; fuses under jit.
    return out[:n] if n_pad != n else out


# ---------------------------------------------------------------------------
# D >= 128 (or D not dividing 128): tile over rows and (optionally) D
# ---------------------------------------------------------------------------
def _encode_wide(t, w, b, n, d, max_block_elems, out_dtype):
    out_bytes = jnp.dtype(out_dtype).itemsize
    if d % _LANES == 0 and d > 512:
        td = _LANES
        for cand in (512, 384, 256, 128):
            if d % cand == 0:
                td = cand
                break
    else:
        td = d                                     # full D in one block

    if b is not None:
        # Fold the bias into the matmul: ones column x bias row.
        t = jnp.concatenate([t, jnp.ones((n, 1), jnp.float32)], axis=1)
        w = jnp.concatenate([w, b], axis=0)
    k = w.shape[0]

    br = _pick_block_rows(n, td, d, out_bytes, max_block_elems)

    return pl.pallas_call(
        _phase_cos_kernel,
        out_shape=jax.ShapeDtypeStruct((n, d), out_dtype),
        grid=(pl.cdiv(n, br), d // td),
        in_specs=[pl.BlockSpec((br, k), lambda i, j: (i, 0)),
                  pl.BlockSpec((k, td), lambda i, j: (0, j))],
        out_specs=pl.BlockSpec((br, td), lambda i, j: (i, j)),
        compiler_params=pltpu.CompilerParams(
            dimension_semantics=("parallel", "parallel"),
            vmem_limit_bytes=_vmem_limit(br, td, k, out_bytes)),
        cost_estimate=_cost(n, d, k, out_bytes),
    )(t, w)


# ---------------------------------------------------------------------------
# Public wrapper
# ---------------------------------------------------------------------------
def time_encoding(t, w, b=None, *, max_block_elems=2 * 1024 * 1024,
                  out_dtype=jnp.float32):
    """Compute enc[n, d] = cos(t[n] * w[d] + b[d]) with a Pallas TPU kernel.

    Args:
      t: (N,) or (N, 1) time tensor (any float/int dtype; cast to f32).
      w: (1, D) basis frequencies.
      b: optional (1, D) phase bias; None (e.g. TGAT's zero bias) folds nothing.
      max_block_elems: target output elements per grid block (~8 MiB f32 default).
      out_dtype: output dtype (jnp.bfloat16 recommended for consumers that
        tolerate it — halves the only large HBM stream).
    Returns:
      (N, D) time encoding.
    """
    t = _prepare_input(t)                          # (N, 1) f32
    n = t.shape[0]
    d = int(w.shape[-1])
    w = jnp.asarray(w, jnp.float32).reshape(1, d)
    if b is not None:
        b = jnp.asarray(b, jnp.float32).reshape(1, d)

    fold = _LANES // d if (d < _LANES and _LANES % d == 0) else 1
    if fold > 1:
        return _encode_folded(t, w, b, n, d, fold, max_block_elems, out_dtype)
    return _encode_wide(t, w, b, n, d, max_block_elems, out_dtype)


def make_params(dimension):
    """Deterministic TGAT-style basis: w = 1/10**linspace(0,9,D), zero bias."""
    basis_freq = 1.0 / (10.0 ** jnp.linspace(0.0, 9.0, dimension))
    return basis_freq.reshape(1, dimension).astype(jnp.float32)


if __name__ == "__main__":
    key = jax.random.PRNGKey(0)
    k1, k2, k3, k4, k5 = jax.random.split(key, 5)

    # --- Case 1: TGAT default (D = 32, zero bias), ragged N, 1-D times -------
    d1, n1 = 32, 203
    t1 = jax.random.uniform(k1, (n1,), dtype=jnp.float32) * 10.0
    w1 = make_params(d1)
    out1 = jax.block_until_ready(time_encoding(t1, w1))            # folded path
    ref1 = jnp.cos(_prepare_input(t1) * w1)
    assert out1.shape == (n1, d1)
    assert jnp.allclose(out1, ref1, atol=1e-4, rtol=1e-4)

    # --- Case 2: D = 32 with a non-zero bias, 2-D (N, 1) times ---------------
    t2 = jax.random.uniform(k2, (n1, 1), dtype=jnp.float32) * 10.0
    b2 = jax.random.normal(k3, (1, d1), dtype=jnp.float32)
    out2 = jax.block_until_ready(time_encoding(t2, w1, b2))
    ref2 = jnp.cos(_prepare_input(t2) * w1 + b2)
    assert jnp.allclose(out2, ref2, atol=1e-4, rtol=1e-4)

    # --- Case 3: wide encoding (D = 128): lane-dense path without folding ----
    d3, n3 = 128, 64
    t3 = jax.random.uniform(k4, (n3,), dtype=jnp.float32) * 10.0
    w3 = make_params(d3)
    out3 = jax.block_until_ready(time_encoding(t3, w3))             # wide path
    ref3 = jnp.cos(_prepare_input(t3) * w3)
    assert out3.shape == (n3, d3)
    assert jnp.allclose(out3, ref3, atol=1e-4, rtol=1e-4)

    # --- Case 4: multi-block grid with a partial last block (ragged N) -------
    n4 = 900
    t4 = jax.random.uniform(k5, (n4,), dtype=jnp.float32) * 10.0
    out4 = jax.block_until_ready(
        time_encoding(t4, w1, max_block_elems=8 * 1024))   # forces several blocks
    ref4 = jnp.cos(_prepare_input(t4) * w1)
    assert out4.shape == (n4, d1)
    assert jnp.allclose(out4, ref4, atol=1e-4, rtol=1e-4)

    # --- Case 5: bf16 output (halved write bandwidth) -------------------------
    out5 = jax.block_until_ready(time_encoding(t3, w3, out_dtype=jnp.bfloat16))
    assert out5.dtype == jnp.bfloat16
    assert jnp.allclose(out5.astype(jnp.float32), ref3, atol=2e-2, rtol=2e-2)

    print("KERNEL_OK")
</pallas_src>

<mosaic_0001>
module attributes {stable_mosaic.version = 11 : i64} {
  func.func @_phase_cos_kernel(%arg0: i32, %arg1: memref<56x4xf32, #tpu.memory_space<vmem>>, %arg2: memref<4x128xf32, #tpu.memory_space<vmem>>, %arg3: memref<56x128xf32, #tpu.memory_space<vmem>>) attributes {dimension_semantics = [#tpu.dimension_semantics<parallel>], iteration_bounds = array<i64: 1>, scalar_prefetch = 0 : i64, scratch_operands = 0 : i64, tpu.core_type = #tpu.core_type<tc>, window_params = [{transform_indices = @transform_0, window_bounds = array<i64: 56, 4>}, {pipeline_mode = #tpu.pipeline_mode<synchronous>, transform_indices = @transform_1, window_bounds = array<i64: 4, 128>}, {transform_indices = @transform_2, window_bounds = array<i64: 56, 128>}]} {
    %c0 = arith.constant 0 : index
    %c0_0 = arith.constant 0 : index
    %0 = vector.load %arg1[%c0, %c0_0] : memref<56x4xf32, #tpu.memory_space<vmem>>, vector<56x4xf32>
    %c0_1 = arith.constant 0 : index
    %c0_2 = arith.constant 0 : index
    %1 = vector.load %arg2[%c0_1, %c0_2] : memref<4x128xf32, #tpu.memory_space<vmem>>, vector<4x128xf32>
    %cst = arith.constant dense<0.000000e+00> : vector<56x128xf32>
    %2 = tpu.matmul %0, %1, %cst {dimension_numbers = #tpu.dot_dimension_numbers<[1], [0], [0], [1], [0, 0, 1, 1], [], []>, precision = #tpu.contract_precision<fp32>} : vector<56x4xf32>, vector<4x128xf32>, vector<56x128xf32> -> vector<56x128xf32>
    %3 = math.cos %2 : vector<56x128xf32>
    %c0_3 = arith.constant 0 : index
    %c0_4 = arith.constant 0 : index
    %4 = vector.load %arg3[%c0_3, %c0_4] : memref<56x128xf32, #tpu.memory_space<vmem>>, vector<56x128xf32>
    tpu.vector_store %arg3[%c0_3, %c0_4], %3 {strides = array<i32>} : memref<56x128xf32, #tpu.memory_space<vmem>>, vector<56x128xf32>,
    return
  }
  func.func @transform_0(%arg0: i32) -> (i32, i32) {
    %c0_i32 = arith.constant 0 : i32
    %c0_i32_0 = arith.constant 0 : i32
    return %arg0, %c0_i32 : i32, i32
  }
  func.func @transform_1(%arg0: i32) -> (i32, i32) {
    %c0_i32 = arith.constant 0 : i32
    %c0_i32_0 = arith.constant 0 : i32
    %c0_i32_1 = arith.constant 0 : i32
    return %c0_i32, %c0_i32_0 : i32, i32
  }
  func.func @transform_2(%arg0: i32) -> (i32, i32) {
    %c0_i32 = arith.constant 0 : i32
    %c0_i32_0 = arith.constant 0 : i32
    return %arg0, %c0_i32 : i32, i32
  }
}

</mosaic_0001>

<llo_original>
// kernel: tpu_custom_call.1
$region0: #{tpu_custom_call.1}
  #allocation0 [shape = 'u32[]', space=smem, size = 0x4, offset = 0x4, fixed_abs, tag = 'smem constant byte address 0x4 - core index']
  #allocation1 [shape = 'u32[72,128]{1,0:T(1,128)}', space=vmem, size = 0x9000, scoped, tag = 'internal scratch']
  %s0 = inlined_call_operand.vmem [shape: f32[56,4], index: 0, kind: input, shape index: {}]
  %s1 = inlined_call_operand.vmem [shape: f32[4,128], index: 1, kind: input, shape index: {}]
  %s2 = inlined_call_operand.hbm [shape: f32[56,128], index: 2, kind: output, shape index: {}]
  %s3 = sld [smem:[#allocation0]]
  $region18: #{tpu_custom_call.1} parent=0
    _
  %s5 = ssub.s32 1, %s3
  %s6 = scalar_select 0, %s5, %s3
  $region1: #{tpu_custom_call.1} parent=0
    #allocation2 [shape = 'u8[28672]{0}', space=vmem, size = 0x7000, scoped, tag = 'output window, operand 0, single buffered']
    #allocation3 [shape = 's32[1]{0}', space=sflag, size = 0x4, scoped, tag = 'scoped memory for tpu_custom_call.1']
    %7 = vsyncpa [#allocation3], 0
    // Predicated region
    $region2: #{tpu_custom_call.1} parent=1 // pred_check
      _
    $region3: #{tpu_custom_call.1} parent=1 // pred_check_branch
      %9 = sbr.rel (0) target = $region5
    $region4: #{tpu_custom_call.1} parent=1 // pred_region
      _
    $region5: #{tpu_custom_call.1} parent=1 // pred_fallthru
      _
    // Predicated region
    $region6: #{tpu_custom_call.1} parent=1 // pred_check
      _
    $region7: #{tpu_custom_call.1} parent=1 // pred_check_branch
      %11 = sbr.rel (0) target = $region9
    $region8: #{tpu_custom_call.1} parent=1 // pred_region
      _
    $region9: #{tpu_custom_call.1} parent=1 // pred_fallthru
      _
    %v12 = vld [vmem:[%s0] sm:$0xff]
    %v13 = vld [vmem:[%s0 + $0x8] sm:$0xff]
    %v14 = vld [vmem:[%s0 + $0x10] sm:$0xff]
    %v15 = vld [vmem:[%s0 + $0x18] sm:$0xff]
    %v16 = vld [vmem:[%s0 + $0x20] sm:$0xff]
    %v17 = vld [vmem:[%s0 + $0x28] sm:$0xff]
    %v18 = vld [vmem:[%s0 + $0x30] sm:$0xff]
    %v19 = vld [vmem:[%s1] sm:$0xf]
    %vm20 = vcmask 31744
    %v22 = vsel %vm20, %v12, 0
    %v25 = vsel %vm20, %v13, 0
    %v28 = vsel %vm20, %v14, 0
    %v31 = vsel %vm20, %v15, 0
    %v34 = vsel %vm20, %v16, 0
    %v37 = vsel %vm20, %v17, 0
    %v40 = vsel %vm20, %v18, 0
    %vm42 = vcmask 1043456
    %v44 = vsel %vm42, %v19, 0
    %46 = vmatpush.msra.mxu0 0.0
    %47 = vmatpush.msra.mxu0 0.0
    %48 = vmatpush.msra.mxu0 0.0
    %49 = vmatpush.msra.mxu0 0.0
    %50 = vmatpush.msra.mxu0 0.0
    %51 = vmatpush.msra.mxu0 0.0
    %52 = vmatpush.msra.mxu0 0.0
    %53 = vmatpush.msra.mxu0 0.0
    %54 = vmatpush.msra.mxu0 0.0
    %55 = vmatpush.msra.mxu0 0.0
    %56 = vmatpush.msra.mxu0 0.0
    %57 = vmatpush.msra.mxu0 0.0
    %58 = vmatpush.msra.mxu0 0.0
    %59 = vmatpush.msra.mxu0 0.0
    %60 = vmatpush.msra.mxu0 0.0
    %v61 = vand.u32 %v44, 4294901760
    %62 = vmatpush.msra.mxu0 %v61
    %v63 = vand.u32 %v22, 4294901760
    %v64 = vsub.f32 %v22, %v63
    %v65 = vand.u32 %v64, 4294901760
    %v66 = vsub.f32 %v64, %v65
    %v67 = vand.u32 %v66, 4294901760
    %68 = vmatmul.f32.gmra.mxu0 %v67
    %v69 = vpop.f32.mrf.mxu0
    %v70 = vadd.f32 0.0, %v69
    %v71 = vand.u32 %v25, 4294901760
    %v72 = vsub.f32 %v25, %v71
    %v73 = vand.u32 %v72, 4294901760
    %v74 = vsub.f32 %v72, %v73
    %v75 = vand.u32 %v74, 4294901760
    %76 = vmatmul.f32.gmra.mxu0 %v75
    %v77 = vpop.f32.mrf.mxu0
    %v78 = vadd.f32 0.0, %v77
    %v79 = vand.u32 %v28, 4294901760
    %v80 = vsub.f32 %v28, %v79
    %v81 = vand.u32 %v80, 4294901760
    %v82 = vsub.f32 %v80, %v81
    %v83 = vand.u32 %v82, 4294901760
    %84 = vmatmul.f32.gmra.mxu0 %v83
    %v85 = vpop.f32.mrf.mxu0
    %v86 = vadd.f32 0.0, %v85
    %v87 = vand.u32 %v31, 4294901760
    %v88 = vsub.f32 %v31, %v87
    %v89 = vand.u32 %v88, 4294901760
    %v90 = vsub.f32 %v88, %v89
    %v91 = vand.u32 %v90, 4294901760
    %92 = vmatmul.f32.gmra.mxu0 %v91
    %v93 = vpop.f32.mrf.mxu0
    %v94 = vadd.f32 0.0, %v93
    %v95 = vand.u32 %v34, 4294901760
    %v96 = vsub.f32 %v34, %v95
    %v97 = vand.u32 %v96, 4294901760
    %v98 = vsub.f32 %v96, %v97
    %v99 = vand.u32 %v98, 4294901760
    %100 = vmatmul.f32.gmra.mxu0 %v99
    %v101 = vpop.f32.mrf.mxu0
    %v102 = vadd.f32 0.0, %v101
    %v103 = vand.u32 %v37, 4294901760
    %v104 = vsub.f32 %v37, %v103
    %v105 = vand.u32 %v104, 4294901760
    %v106 = vsub.f32 %v104, %v105
    %v107 = vand.u32 %v106, 4294901760
    %108 = vmatmul.f32.gmra.mxu0 %v107
    %v109 = vpop.f32.mrf.mxu0
    %v110 = vadd.f32 0.0, %v109
    %v111 = vand.u32 %v40, 4294901760
    %v112 = vsub.f32 %v40, %v111
    %v113 = vand.u32 %v112, 4294901760
    %v114 = vsub.f32 %v112, %v113
    %v115 = vand.u32 %v114, 4294901760
    %116 = vmatmul.f32.gmra.mxu0 %v115
    %v117 = vpop.f32.mrf.mxu0
    %v118 = vadd.f32 0.0, %v117
    %119 = vdwg.mxu0
    %120 = vmatpush.msra.mxu0 0.0
    %121 = vmatpush.msra.mxu0 0.0
    %122 = vmatpush.msra.mxu0 0.0
    %123 = vmatpush.msra.mxu0 0.0
    %124 = vmatpush.msra.mxu0 0.0
    %125 = vmatpush.msra.mxu0 0.0
    %126 = vmatpush.msra.mxu0 0.0
    %127 = vmatpush.msra.mxu0 0.0
    %128 = vmatpush.msra.mxu0 0.0
    %129 = vmatpush.msra.mxu0 0.0
    %130 = vmatpush.msra.mxu0 0.0
    %131 = vmatpush.msra.mxu0 0.0
    %132 = vmatpush.msra.mxu0 0.0
    %133 = vmatpush.msra.mxu0 0.0
    %134 = vmatpush.msra.mxu0 0.0
    %v135 = vand.u32 %v44, 4294901760
    %v136 = vsub.f32 %v44, %v135
    %v137 = vand.u32 %v136, 4294901760
    %v138 = vsub.f32 %v136, %v137
    %v139 = vand.u32 %v138, 4294901760
    %140 = vmatpush.msra.mxu0 %v139
    %v141 = vand.u32 %v22, 4294901760
    %142 = vmatmul.f32.gmra.mxu0 %v141
    %v143 = vpop.f32.mrf.mxu0
    %v144 = vadd.f32 %v70, %v143
    %v145 = vand.u32 %v25, 4294901760
    %146 = vmatmul.f32.gmra.mxu0 %v145
    %v147 = vpop.f32.mrf.mxu0
    %v148 = vadd.f32 %v78, %v147
    %v149 = vand.u32 %v28, 4294901760
    %150 = vmatmul.f32.gmra.mxu0 %v149
    %v151 = vpop.f32.mrf.mxu0
    %v152 = vadd.f32 %v86, %v151
    %v153 = vand.u32 %v31, 4294901760
    %154 = vmatmul.f32.gmra.mxu0 %v153
    %v155 = vpop.f32.mrf.mxu0
    %v156 = vadd.f32 %v94, %v155
    %v157 = vand.u32 %v34, 4294901760
    %158 = vmatmul.f32.gmra.mxu0 %v157
    %v159 = vpop.f32.mrf.mxu0
    %v160 = vadd.f32 %v102, %v159
    %v161 = vand.u32 %v37, 4294901760
    %162 = vmatmul.f32.gmra.mxu0 %v161
    %v163 = vpop.f32.mrf.mxu0
    %v164 = vadd.f32 %v110, %v163
    %v165 = vand.u32 %v40, 4294901760
    %166 = vmatmul.f32.gmra.mxu0 %v165
    %v167 = vpop.f32.mrf.mxu0
    %v168 = vadd.f32 %v118, %v167
    %169 = vdwg.mxu0
    %170 = vmatpush.msra.mxu0 0.0
    %171 = vmatpush.msra.mxu0 0.0
    %172 = vmatpush.msra.mxu0 0.0
    %173 = vmatpush.msra.mxu0 0.0
    %174 = vmatpush.msra.mxu0 0.0
    %175 = vmatpush.msra.mxu0 0.0
    %176 = vmatpush.msra.mxu0 0.0
    %177 = vmatpush.msra.mxu0 0.0
    %178 = vmatpush.msra.mxu0 0.0
    %179 = vmatpush.msra.mxu0 0.0
    %180 = vmatpush.msra.mxu0 0.0
    %181 = vmatpush.msra.mxu0 0.0
    %182 = vmatpush.msra.mxu0 0.0
    %183 = vmatpush.msra.mxu0 0.0
    %184 = vmatpush.msra.mxu0 0.0
    %v185 = vand.u32 %v44, 4294901760
    %v186 = vsub.f32 %v44, %v185
    %187 = vmatpush.msra.mxu0 %v186
    %v188 = vand.u32 %v22, 4294901760
    %v189 = vsub.f32 %v22, %v188
    %190 = vmatmul.f32.gmra.mxu0 %v189
    %v191 = vpop.f32.mrf.mxu0
    %v192 = vadd.f32 %v144, %v191
    %v193 = vand.u32 %v25, 4294901760
    %v194 = vsub.f32 %v25, %v193
    %195 = vmatmul.f32.gmra.mxu0 %v194
    %v196 = vpop.f32.mrf.mxu0
    %v197 = vadd.f32 %v148, %v196
    %v198 = vand.u32 %v28, 4294901760
    %v199 = vsub.f32 %v28, %v198
    %200 = vmatmul.f32.gmra.mxu0 %v199
    %v201 = vpop.f32.mrf.mxu0
    %v202 = vadd.f32 %v152, %v201
    %v203 = vand.u32 %v31, 4294901760
    %v204 = vsub.f32 %v31, %v203
    %205 = vmatmul.f32.gmra.mxu0 %v204
    %v206 = vpop.f32.mrf.mxu0
    %v207 = vadd.f32 %v156, %v206
    %v208 = vand.u32 %v34, 4294901760
    %v209 = vsub.f32 %v34, %v208
    %210 = vmatmul.f32.gmra.mxu0 %v209
    %v211 = vpop.f32.mrf.mxu0
    %v212 = vadd.f32 %v160, %v211
    %v213 = vand.u32 %v37, 4294901760
    %v214 = vsub.f32 %v37, %v213
    %215 = vmatmul.f32.gmra.mxu0 %v214
    %v216 = vpop.f32.mrf.mxu0
    %v217 = vadd.f32 %v164, %v216
    %v218 = vand.u32 %v40, 4294901760
    %v219 = vsub.f32 %v40, %v218
    %220 = vmatmul.f32.gmra.mxu0 %v219
    %v221 = vpop.f32.mrf.mxu0
    %v222 = vadd.f32 %v168, %v221
    %223 = vdwg.mxu0
    %224 = vmatpush.msra.mxu0 0.0
    %225 = vmatpush.msra.mxu0 0.0
    %226 = vmatpush.msra.mxu0 0.0
    %227 = vmatpush.msra.mxu0 0.0
    %228 = vmatpush.msra.mxu0 0.0
    %229 = vmatpush.msra.mxu0 0.0
    %230 = vmatpush.msra.mxu0 0.0
    %231 = vmatpush.msra.mxu0 0.0
    %232 = vmatpush.msra.mxu0 0.0
    %233 = vmatpush.msra.mxu0 0.0
    %234 = vmatpush.msra.mxu0 0.0
    %235 = vmatpush.msra.mxu0 0.0
    %236 = vmatpush.msra.mxu0 0.0
    %237 = vmatpush.msra.mxu0 0.0
    %238 = vmatpush.msra.mxu0 0.0
    %v239 = vand.u32 %v44, 4294901760
    %240 = vmatpush.msra.mxu0 %v239
    %v241 = vand.u32 %v22, 4294901760
    %v242 = vsub.f32 %v22, %v241
    %v243 = vand.u32 %v242, 4294901760
    %244 = vmatmul.f32.gmra.mxu0 %v243
    %v245 = vpop.f32.mrf.mxu0
    %v246 = vadd.f32 %v192, %v245
    %v247 = vand.u32 %v25, 4294901760
    %v248 = vsub.f32 %v25, %v247
    %v249 = vand.u32 %v248, 4294901760
    %250 = vmatmul.f32.gmra.mxu0 %v249
    %v251 = vpop.f32.mrf.mxu0
    %v252 = vadd.f32 %v197, %v251
    %v253 = vand.u32 %v28, 4294901760
    %v254 = vsub.f32 %v28, %v253
    %v255 = vand.u32 %v254, 4294901760
    %256 = vmatmul.f32.gmra.mxu0 %v255
    %v257 = vpop.f32.mrf.mxu0
    %v258 = vadd.f32 %v202, %v257
    %v259 = vand.u32 %v31, 4294901760
    %v260 = vsub.f32 %v31, %v259
    %v261 = vand.u32 %v260, 4294901760
    %262 = vmatmul.f32.gmra.mxu0 %v261
    %v263 = vpop.f32.mrf.mxu0
    %v264 = vadd.f32 %v207, %v263
    %v265 = vand.u32 %v34, 4294901760
    %v266 = vsub.f32 %v34, %v265
    %v267 = vand.u32 %v266, 4294901760
    %268 = vmatmul.f32.gmra.mxu0 %v267
    %v269 = vpop.f32.mrf.mxu0
    %v270 = vadd.f32 %v212, %v269
    %v271 = vand.u32 %v37, 4294901760
    %v272 = vsub.f32 %v37, %v271
    %v273 = vand.u32 %v272, 4294901760
    %274 = vmatmul.f32.gmra.mxu0 %v273
    %v275 = vpop.f32.mrf.mxu0
    %v276 = vadd.f32 %v217, %v275
    %v277 = vand.u32 %v40, 4294901760
    %v278 = vsub.f32 %v40, %v277
    %v279 = vand.u32 %v278, 4294901760
    %280 = vmatmul.f32.gmra.mxu0 %v279
    %v281 = vpop.f32.mrf.mxu0
    %v282 = vadd.f32 %v222, %v281
    %283 = vdwg.mxu0
    %284 = vmatpush.msra.mxu0 0.0
    %285 = vmatpush.msra.mxu0 0.0
    %286 = vmatpush.msra.mxu0 0.0
    %287 = vmatpush.msra.mxu0 0.0
    %288 = vmatpush.msra.mxu0 0.0
    %289 = vmatpush.msra.mxu0 0.0
    %290 = vmatpush.msra.mxu0 0.0
    %291 = vmatpush.msra.mxu0 0.0
    %292 = vmatpush.msra.mxu0 0.0
    %293 = vmatpush.msra.mxu0 0.0
    %294 = vmatpush.msra.mxu0 0.0
    %295 = vmatpush.msra.mxu0 0.0
    %296 = vmatpush.msra.mxu0 0.0
    %297 = vmatpush.msra.mxu0 0.0
    %298 = vmatpush.msra.mxu0 0.0
    %v299 = vand.u32 %v44, 4294901760
    %v300 = vsub.f32 %v44, %v299
    %v301 = vand.u32 %v300, 4294901760
    %302 = vmatpush.msra.mxu0 %v301
    %v303 = vand.u32 %v22, 4294901760
    %304 = vmatmul.f32.gmra.mxu0 %v303
    %v305 = vpop.f32.mrf.mxu0
    %v306 = vadd.f32 %v246, %v305
    %v307 = vand.u32 %v25, 4294901760
    %308 = vmatmul.f32.gmra.mxu0 %v307
    %v309 = vpop.f32.mrf.mxu0
    %v310 = vadd.f32 %v252, %v309
    %v311 = vand.u32 %v28, 4294901760
    %312 = vmatmul.f32.gmra.mxu0 %v311
    %v313 = vpop.f32.mrf.mxu0
    %v314 = vadd.f32 %v258, %v313
    %v315 = vand.u32 %v31, 4294901760
    %316 = vmatmul.f32.gmra.mxu0 %v315
    %v317 = vpop.f32.mrf.mxu0
    %v318 = vadd.f32 %v264, %v317
    %v319 = vand.u32 %v34, 4294901760
    %320 = vmatmul.f32.gmra.mxu0 %v319
    %v321 = vpop.f32.mrf.mxu0
    %v322 = vadd.f32 %v270, %v321
    %v323 = vand.u32 %v37, 4294901760
    %324 = vmatmul.f32.gmra.mxu0 %v323
    %v325 = vpop.f32.mrf.mxu0
    %v326 = vadd.f32 %v276, %v325
    %v327 = vand.u32 %v40, 4294901760
    %328 = vmatmul.f32.gmra.mxu0 %v327
    %v329 = vpop.f32.mrf.mxu0
    %v330 = vadd.f32 %v282, %v329
    %331 = vdwg.mxu0
    %332 = vmatpush.msra.mxu0 0.0
    %333 = vmatpush.msra.mxu0 0.0
    %334 = vmatpush.msra.mxu0 0.0
    %335 = vmatpush.msra.mxu0 0.0
    %336 = vmatpush.msra.mxu0 0.0
    %337 = vmatpush.msra.mxu0 0.0
    %338 = vmatpush.msra.mxu0 0.0
    %339 = vmatpush.msra.mxu0 0.0
    %340 = vmatpush.msra.mxu0 0.0
    %341 = vmatpush.msra.mxu0 0.0
    %342 = vmatpush.msra.mxu0 0.0
    %343 = vmatpush.msra.mxu0 0.0
    %344 = vmatpush.msra.mxu0 0.0
    %345 = vmatpush.msra.mxu0 0.0
    %346 = vmatpush.msra.mxu0 0.0
    %v347 = vand.u32 %v44, 4294901760
    %348 = vmatpush.msra.mxu0 %v347
    %v349 = vand.u32 %v22, 4294901760
    %350 = vmatmul.f32.gmra.mxu0 %v349
    %v351 = vpop.f32.mrf.mxu0
    %v352 = vadd.f32 %v306, %v351
    %v353 = vand.u32 %v25, 4294901760
    %354 = vmatmul.f32.gmra.mxu0 %v353
    %v355 = vpop.f32.mrf.mxu0
    %v356 = vadd.f32 %v310, %v355
    %v357 = vand.u32 %v28, 4294901760
    %358 = vmatmul.f32.gmra.mxu0 %v357
    %v359 = vpop.f32.mrf.mxu0
    %v360 = vadd.f32 %v314, %v359
    %v361 = vand.u32 %v31, 4294901760
    %362 = vmatmul.f32.gmra.mxu0 %v361
    %v363 = vpop.f32.mrf.mxu0
    %v364 = vadd.f32 %v318, %v363
    %v365 = vand.u32 %v34, 4294901760
    %366 = vmatmul.f32.gmra.mxu0 %v365
    %v367 = vpop.f32.mrf.mxu0
    %v368 = vadd.f32 %v322, %v367
    %v369 = vand.u32 %v37, 4294901760
    %370 = vmatmul.f32.gmra.mxu0 %v369
    %v371 = vpop.f32.mrf.mxu0
    %v372 = vadd.f32 %v326, %v371
    %v373 = vand.u32 %v40, 4294901760
    %374 = vmatmul.f32.gmra.mxu0 %v373
    %v375 = vpop.f32.mrf.mxu0
    %v376 = vadd.f32 %v330, %v375
    %377 = vdwg.mxu0
    %v378 = vand.u32 2147483647, %v352
    %vm379 = vcmp.le.f32.partialorder %v378, 0.7853982
    %vm380 = vcmp.lt.s32.totalorder %v352, 0
    %v381 = vand.u32 %v352, 2139095040
    %v382 = vshrl.u32 %v381, 23
    %v383 = vsub.s32 %v382, 127
    %v384 = vand.u32 2147483647, %v352
    %v385 = vand.u32 %v384, 8388607
    %v386 = vor.u32 %v385, 8388608
    %v387 = vsub.s32 0, %v386
    %v388 = vadd.s32 %v383, 1
    %vm389 = vcmp.gt.s32.totalorder %v388, 0
    %v390 = vsel %vm389, %v388, 0
    %v391 = vshrl.u32 %v390, 5
    %v392 = vand.u32 %v390, 31
    %v393 = vsub.s32 32, %v392
    %v394 = vshrl.u32 683565275, %v393
    %v395 = vshll.u32 683565275, %v392
    %v396 = vshrl.u32 2475754826, %v393
    %v397 = vor.u32 %v395, %v396
    %v398 = vshll.u32 2475754826, %v392
    %v399 = vshrl.u32 2131351028, %v393
    %v400 = vor.u32 %v398, %v399
    %v401 = vshll.u32 2131351028, %v392
    %v402 = vshrl.u32 2102212464, %v393
    %v403 = vor.u32 %v401, %v402
    %v404 = vshll.u32 2102212464, %v392
    %v405 = vshrl.u32 920167782, %v393
    %v406 = vor.u32 %v404, %v405
    %v407 = vshll.u32 920167782, %v392
    %v408 = vshrl.u32 1326507024, %v393
    %v409 = vor.u32 %v407, %v408
    %vm410 = vcmp.lt.s32.totalorder %v391, 1
    %vm411 = vcmp.lt.s32.totalorder %v391, 2
    %vm412 = vcmp.lt.s32.totalorder %v391, 3
    %vm413 = vcmp.lt.s32.totalorder %v391, 4
    %v414 = vsel %vm410, %v394, %v397
    %v415 = vsel %vm413, %v403, 2102212464
    %v416 = vsel %vm412, %v400, %v415
    %v417 = vsel %vm411, %v414, %v416
    %v418 = vsel %vm410, %v397, %v400
    %v419 = vsel %vm413, %v406, 920167782
    %v420 = vsel %vm412, %v403, %v419
    %v421 = vsel %vm411, %v418, %v420
    %v422 = vsel %vm410, %v400, %v403
    %v423 = vsel %vm413, %v409, 1326507024
    %v424 = vsel %vm412, %v406, %v423
    %v425 = vsel %vm411, %v422, %v424
    %v426 = vshll.u32 %v386, 8
    %v427 = vand.u32 %v426, 65535
    %v428 = vshrl.u32 %v426, 16
    %v429 = vand.u32 %v425, 65535
    %v430 = vshrl.u32 %v425, 16
    %v431 = vmul.u32 %v427, %v429
    %v432 = vmul.u32 %v427, %v430
    %v433 = vmul.u32 %v428, %v429
    %v434 = vmul.u32 %v428, %v430
    %v435 = vshll.u32 %v432, 16
    %v436 = vshrl.u32 %v432, 16
    %v437 = vshll.u32 %v433, 16
    %v438 = vshrl.u32 %v433, 16
    %vm439 = vc.u32 %v431, %v435
    %v440 = vsel %vm439, 1, 0
    %v441 = vadd.s32 %v431, %v435
    %v442 = vadd.s32 %v434, %v440
    %vm443 = vc.u32 %v441, %v437
    %v444 = vsel %vm443, 1, 0
    %v445 = vadd.s32 %v441, %v437
    %v446 = vadd.s32 %v442, %v444
    %v447 = vadd.s32 %v446, %v436
    %v448 = vadd.s32 %v447, %v438
    %v449 = vand.u32 %v426, 65535
    %v450 = vshrl.u32 %v426, 16
    %v451 = vand.u32 %v421, 65535
    %v452 = vshrl.u32 %v421, 16
    %v453 = vmul.u32 %v449, %v451
    %v454 = vmul.u32 %v449, %v452
    %v455 = vmul.u32 %v450, %v451
    %v456 = vmul.u32 %v450, %v452
    %v457 = vshll.u32 %v454, 16
    %v458 = vshrl.u32 %v454, 16
    %v459 = vshll.u32 %v455, 16
    %v460 = vshrl.u32 %v455, 16
    %vm461 = vc.u32 %v453, %v457
    %v462 = vsel %vm461, 1, 0
    %v463 = vadd.s32 %v453, %v457
    %v464 = vadd.s32 %v456, %v462
    %vm465 = vc.u32 %v463, %v459
    %v466 = vsel %vm465, 1, 0
    %v467 = vadd.s32 %v463, %v459
    %v468 = vadd.s32 %v464, %v466
    %v469 = vadd.s32 %v468, %v458
    %v470 = vadd.s32 %v469, %v460
    %v471 = vmul.u32 %v426, %v417
    %v472 = vadd.s32 %v448, %v467
    %vm473 = vc.u32 %v448, %v467
    %v474 = vadd.s32 %v470, 1
    %v475 = vsel %vm473, %v474, %v470
    %v476 = vadd.s32 %v471, %v475
    %v477 = vadd.s32 %v476, 536870912
    %v478 = vshrl.u32 %v477, 30
    %v479 = vshll.u32 %v478, 30
    %v480 = vsub.s32 %v476, %v479
    %vm481 = vcmp.lt.s32.totalorder %v480, 0
    %v482 = vsub.s32 0, %v480
    %v483 = vsel %vm481, %v482, %v480
    %v484 = vclz %v483
    %v485 = vsub.s32 %v484, 2
    %vm486 = vcmp.gt.s32.totalorder 0, %v485
    %v487 = vsel %vm486, 0, %v485
    %v488 = vsub.s32 32, %v487
    %v489 = vshll.u32 %v480, %v487
    %v490 = vshrl.u32 %v472, %v488
    %v491 = vor.u32 %v489, %v490
    %v492 = vsub.s32 4294967266, %v487
    %v493 = vadd.s32 %v492, 127
    %v494 = vshll.u32 %v493, 23
    %v495 = vor.u32 4788187, %v494
    %v496 = vand.u32 2147483647, %v495
    %v498 = vcvt.s32.f32 %v491
    %v499 = vmul.f32 %v498, %v496
    %v500 = vxor.u32 %v499, 2147483648
    %v501 = vsel %vm380, %v500, %v499
    %v502 = vsub.s32 4, %v478
    %v503 = vsel %vm380, %v502, %v478
    %v504 = vsel %vm379, %v352, %v501
    %v505 = vsel %vm379, 0, %v503
    %v506 = vmul.f32 %v504, %v504
    %v507 = vmul.f32 %v506, -0.001358992
    %v508 = vadd.f32 %v507, 0.041655596
    %v509 = vmul.f32 %v506, %v508
    %v510 = vadd.f32 %v509, -0.4999988
    %v511 = vmul.f32 %v506, %v510
    %v512 = vadd.f32 1.0, %v511
    %v513 = vmul.f32 %v504, %v504
    %v514 = vmul.f32 %v513, -0.00019511016
    %v515 = vadd.f32 %v514, 0.008332121
    %v516 = vmul.f32 %v513, %v515
    %v517 = vadd.f32 %v516, -0.16666654
    %v518 = vmul.f32 %v513, %v517
    %v519 = vadd.f32 %v518, 1.0
    %v520 = vmul.f32 %v519, %v504
    %vm521 = vweird.f32 %v352
    %v522 = vand.u32 %v505, 3
    %vm523 = vcmp.lt.s32.totalorder %v522, 2
    %vm524 = vcmp.eq.s32.totalorder %v522, 0
    %v525 = vxor.u32 %v520, 2147483648
    %v526 = vsel %vm524, %v512, %v525
    %vm527 = vcmp.eq.s32.totalorder %v522, 2
    %v528 = vxor.u32 %v512, 2147483648
    %v529 = vsel %vm527, %v528, %v520
    %v530 = vsel %vm523, %v526, %v529
    %v531 = vsel %vm521, nan, %v530
    %v532 = vand.u32 2147483647, %v356
    %vm533 = vcmp.le.f32.partialorder %v532, 0.7853982
    %vm534 = vcmp.lt.s32.totalorder %v356, 0
    %v535 = vand.u32 %v356, 2139095040
    %v536 = vshrl.u32 %v535, 23
    %v537 = vsub.s32 %v536, 127
    %v538 = vand.u32 2147483647, %v356
    %v539 = vand.u32 %v538, 8388607
    %v540 = vor.u32 %v539, 8388608
    %v541 = vsub.s32 0, %v540
    %v542 = vadd.s32 %v537, 1
    %vm543 = vcmp.gt.s32.totalorder %v542, 0
    %v544 = vsel %vm543, %v542, 0
    %v545 = vshrl.u32 %v544, 5
    %v546 = vand.u32 %v544, 31
    %v547 = vsub.s32 32, %v546
    %v548 = vshrl.u32 683565275, %v547
    %v549 = vshll.u32 683565275, %v546
    %v550 = vshrl.u32 2475754826, %v547
    %v551 = vor.u32 %v549, %v550
    %v552 = vshll.u32 2475754826, %v546
    %v553 = vshrl.u32 2131351028, %v547
    %v554 = vor.u32 %v552, %v553
    %v555 = vshll.u32 2131351028, %v546
    %v556 = vshrl.u32 2102212464, %v547
    %v557 = vor.u32 %v555, %v556
    %v558 = vshll.u32 2102212464, %v546
    %v559 = vshrl.u32 920167782, %v547
    %v560 = vor.u32 %v558, %v559
    %v561 = vshll.u32 920167782, %v546
    %v562 = vshrl.u32 1326507024, %v547
    %v563 = vor.u32 %v561, %v562
    %vm564 = vcmp.lt.s32.totalorder %v545, 1
    %vm565 = vcmp.lt.s32.totalorder %v545, 2
    %vm566 = vcmp.lt.s32.totalorder %v545, 3
    %vm567 = vcmp.lt.s32.totalorder %v545, 4
    %v568 = vsel %vm564, %v548, %v551
    %v569 = vsel %vm567, %v557, 2102212464
    %v570 = vsel %vm566, %v554, %v569
    %v571 = vsel %vm565, %v568, %v570
    %v572 = vsel %vm564, %v551, %v554
    %v573 = vsel %vm567, %v560, 920167782
    %v574 = vsel %vm566, %v557, %v573
    %v575 = vsel %vm565, %v572, %v574
    %v576 = vsel %vm564, %v554, %v557
    %v577 = vsel %vm567, %v563, 1326507024
    %v578 = vsel %vm566, %v560, %v577
    %v579 = vsel %vm565, %v576, %v578
    %v580 = vshll.u32 %v540, 8
    %v581 = vand.u32 %v580, 65535
    %v582 = vshrl.u32 %v580, 16
    %v583 = vand.u32 %v579, 65535
    %v584 = vshrl.u32 %v579, 16
    %v585 = vmul.u32 %v581, %v583
    %v586 = vmul.u32 %v581, %v584
    %v587 = vmul.u32 %v582, %v583
    %v588 = vmul.u32 %v582, %v584
    %v589 = vshll.u32 %v586, 16
    %v590 = vshrl.u32 %v586, 16
    %v591 = vshll.u32 %v587, 16
    %v592 = vshrl.u32 %v587, 16
    %vm593 = vc.u32 %v585, %v589
    %v594 = vsel %vm593, 1, 0
    %v595 = vadd.s32 %v585, %v589
    %v596 = vadd.s32 %v588, %v594
    %vm597 = vc.u32 %v595, %v591
    %v598 = vsel %vm597, 1, 0
    %v599 = vadd.s32 %v595, %v591
    %v600 = vadd.s32 %v596, %v598
    %v601 = vadd.s32 %v600, %v590
    %v602 = vadd.s32 %v601, %v592
    %v603 = vand.u32 %v580, 65535
    %v604 = vshrl.u32 %v580, 16
    %v605 = vand.u32 %v575, 65535
    %v606 = vshrl.u32 %v575, 16
    %v607 = vmul.u32 %v603, %v605
    %v608 = vmul.u32 %v603, %v606
    %v609 = vmul.u32 %v604, %v605
    %v610 = vmul.u32 %v604, %v606
    %v611 = vshll.u32 %v608, 16
    %v612 = vshrl.u32 %v608, 16
    %v613 = vshll.u32 %v609, 16
    %v614 = vshrl.u32 %v609, 16
    %vm615 = vc.u32 %v607, %v611
    %v616 = vsel %vm615, 1, 0
    %v617 = vadd.s32 %v607, %v611
    %v618 = vadd.s32 %v610, %v616
    %vm619 = vc.u32 %v617, %v613
    %v620 = vsel %vm619, 1, 0
    %v621 = vadd.s32 %v617, %v613
    %v622 = vadd.s32 %v618, %v620
    %v623 = vadd.s32 %v622, %v612
    %v624 = vadd.s32 %v623, %v614
    %v625 = vmul.u32 %v580, %v571
    %v626 = vadd.s32 %v602, %v621
    %vm627 = vc.u32 %v602, %v621
    %v628 = vadd.s32 %v624, 1
    %v629 = vsel %vm627, %v628, %v624
    %v630 = vadd.s32 %v625, %v629
    %v631 = vadd.s32 %v630, 536870912
    %v632 = vshrl.u32 %v631, 30
    %v633 = vshll.u32 %v632, 30
    %v634 = vsub.s32 %v630, %v633
    %vm635 = vcmp.lt.s32.totalorder %v634, 0
    %v636 = vsub.s32 0, %v634
    %v637 = vsel %vm635, %v636, %v634
    %v638 = vclz %v637
    %v639 = vsub.s32 %v638, 2
    %vm640 = vcmp.gt.s32.totalorder 0, %v639
    %v641 = vsel %vm640, 0, %v639
    %v642 = vsub.s32 32, %v641
    %v643 = vshll.u32 %v634, %v641
    %v644 = vshrl.u32 %v626, %v642
    %v645 = vor.u32 %v643, %v644
    %v646 = vsub.s32 4294967266, %v641
    %v647 = vadd.s32 %v646, 127
    %v648 = vshll.u32 %v647, 23
    %v649 = vor.u32 4788187, %v648
    %v650 = vand.u32 2147483647, %v649
    %v652 = vcvt.s32.f32 %v645
    %v653 = vmul.f32 %v652, %v650
    %v654 = vxor.u32 %v653, 2147483648
    %v655 = vsel %vm534, %v654, %v653
    %v656 = vsub.s32 4, %v632
    %v657 = vsel %vm534, %v656, %v632
    %v658 = vsel %vm533, %v356, %v655
    %v659 = vsel %vm533, 0, %v657
    %v660 = vmul.f32 %v658, %v658
    %v661 = vmul.f32 %v660, -0.001358992
    %v662 = vadd.f32 %v661, 0.041655596
    %v663 = vmul.f32 %v660, %v662
    %v664 = vadd.f32 %v663, -0.4999988
    %v665 = vmul.f32 %v660, %v664
    %v666 = vadd.f32 1.0, %v665
    %v667 = vmul.f32 %v658, %v658
    %v668 = vmul.f32 %v667, -0.00019511016
    %v669 = vadd.f32 %v668, 0.008332121
    %v670 = vmul.f32 %v667, %v669
    %v671 = vadd.f32 %v670, -0.16666654
    %v672 = vmul.f32 %v667, %v671
    %v673 = vadd.f32 %v672, 1.0
    %v674 = vmul.f32 %v673, %v658
    %vm675 = vweird.f32 %v356
    %v676 = vand.u32 %v659, 3
    %vm677 = vcmp.lt.s32.totalorder %v676, 2
    %vm678 = vcmp.eq.s32.totalorder %v676, 0
    %v679 = vxor.u32 %v674, 2147483648
    %v680 = vsel %vm678, %v666, %v679
    %vm681 = vcmp.eq.s32.totalorder %v676, 2
    %v682 = vxor.u32 %v666, 2147483648
    %v683 = vsel %vm681, %v682, %v674
    %v684 = vsel %vm677, %v680, %v683
    %v685 = vsel %vm675, nan, %v684
    %v686 = vand.u32 2147483647, %v360
    %vm687 = vcmp.le.f32.partialorder %v686, 0.7853982
    %vm688 = vcmp.lt.s32.totalorder %v360, 0
    %v689 = vand.u32 %v360, 2139095040
    %v690 = vshrl.u32 %v689, 23
    %v691 = vsub.s32 %v690, 127
    %v692 = vand.u32 2147483647, %v360
    %v693 = vand.u32 %v692, 8388607
    %v694 = vor.u32 %v693, 8388608
    %v695 = vsub.s32 0, %v694
    %v696 = vadd.s32 %v691, 1
    %vm697 = vcmp.gt.s32.totalorder %v696, 0
    %v698 = vsel %vm697, %v696, 0
    %v699 = vshrl.u32 %v698, 5
    %v700 = vand.u32 %v698, 31
    %v701 = vsub.s32 32, %v700
    %v702 = vshrl.u32 683565275, %v701
    %v703 = vshll.u32 683565275, %v700
    %v704 = vshrl.u32 2475754826, %v701
    %v705 = vor.u32 %v703, %v704
    %v706 = vshll.u32 2475754826, %v700
    %v707 = vshrl.u32 2131351028, %v701
    %v708 = vor.u32 %v706, %v707
    %v709 = vshll.u32 2131351028, %v700
    %v710 = vshrl.u32 2102212464, %v701
    %v711 = vor.u32 %v709, %v710
    %v712 = vshll.u32 2102212464, %v700
    %v713 = vshrl.u32 920167782, %v701
    %v714 = vor.u32 %v712, %v713
    %v715 = vshll.u32 920167782, %v700
    %v716 = vshrl.u32 1326507024, %v701
    %v717 = vor.u32 %v715, %v716
    %vm718 = vcmp.lt.s32.totalorder %v699, 1
    %vm719 = vcmp.lt.s32.totalorder %v699, 2
    %vm720 = vcmp.lt.s32.totalorder %v699, 3
    %vm721 = vcmp.lt.s32.totalorder %v699, 4
    %v722 = vsel %vm718, %v702, %v705
    %v723 = vsel %vm721, %v711, 2102212464
    %v724 = vsel %vm720, %v708, %v723
    %v725 = vsel %vm719, %v722, %v724
    %v726 = vsel %vm718, %v705, %v708
    %v727 = vsel %vm721, %v714, 920167782
    %v728 = vsel %vm720, %v711, %v727
    %v729 = vsel %vm719, %v726, %v728
    %v730 = vsel %vm718, %v708, %v711
    %v731 = vsel %vm721, %v717, 1326507024
    %v732 = vsel %vm720, %v714, %v731
    %v733 = vsel %vm719, %v730, %v732
    %v734 = vshll.u32 %v694, 8
    %v735 = vand.u32 %v734, 65535
    %v736 = vshrl.u32 %v734, 16
    %v737 = vand.u32 %v733, 65535
    %v738 = vshrl.u32 %v733, 16
    %v739 = vmul.u32 %v735, %v737
    %v740 = vmul.u32 %v735, %v738
    %v741 = vmul.u32 %v736, %v737
    %v742 = vmul.u32 %v736, %v738
    %v743 = vshll.u32 %v740, 16
    %v744 = vshrl.u32 %v740, 16
    %v745 = vshll.u32 %v741, 16
    %v746 = vshrl.u32 %v741, 16
    %vm747 = vc.u32 %v739, %v743
    %v748 = vsel %vm747, 1, 0
    %v749 = vadd.s32 %v739, %v743
    %v750 = vadd.s32 %v742, %v748
    %vm751 = vc.u32 %v749, %v745
    %v752 = vsel %vm751, 1, 0
    %v753 = vadd.s32 %v749, %v745
    %v754 = vadd.s32 %v750, %v752
    %v755 = vadd.s32 %v754, %v744
    %v756 = vadd.s32 %v755, %v746
    %v757 = vand.u32 %v734, 65535
    %v758 = vshrl.u32 %v734, 16
    %v759 = vand.u32 %v729, 65535
    %v760 = vshrl.u32 %v729, 16
    %v761 = vmul.u32 %v757, %v759
    %v762 = vmul.u32 %v757, %v760
    %v763 = vmul.u32 %v758, %v759
    %v764 = vmul.u32 %v758, %v760
    %v765 = vshll.u32 %v762, 16
    %v766 = vshrl.u32 %v762, 16
    %v767 = vshll.u32 %v763, 16
    %v768 = vshrl.u32 %v763, 16
    %vm769 = vc.u32 %v761, %v765
    %v770 = vsel %vm769, 1, 0
    %v771 = vadd.s32 %v761, %v765
    %v772 = vadd.s32 %v764, %v770
    %vm773 = vc.u32 %v771, %v767
    %v774 = vsel %vm773, 1, 0
    %v775 = vadd.s32 %v771, %v767
    %v776 = vadd.s32 %v772, %v774
    %v777 = vadd.s32 %v776, %v766
    %v778 = vadd.s32 %v777, %v768
    %v779 = vmul.u32 %v734, %v725
    %v780 = vadd.s32 %v756, %v775
    %vm781 = vc.u32 %v756, %v775
    %v782 = vadd.s32 %v778, 1
    %v783 = vsel %vm781, %v782, %v778
    %v784 = vadd.s32 %v779, %v783
    %v785 = vadd.s32 %v784, 536870912
    %v786 = vshrl.u32 %v785, 30
    %v787 = vshll.u32 %v786, 30
    %v788 = vsub.s32 %v784, %v787
    %vm789 = vcmp.lt.s32.totalorder %v788, 0
    %v790 = vsub.s32 0, %v788
    %v791 = vsel %vm789, %v790, %v788
    %v792 = vclz %v791
    %v793 = vsub.s32 %v792, 2
    %vm794 = vcmp.gt.s32.totalorder 0, %v793
    %v795 = vsel %vm794, 0, %v793
    %v796 = vsub.s32 32, %v795
    %v797 = vshll.u32 %v788, %v795
    %v798 = vshrl.u32 %v780, %v796
    %v799 = vor.u32 %v797, %v798
    %v800 = vsub.s32 4294967266, %v795
    %v801 = vadd.s32 %v800, 127
    %v802 = vshll.u32 %v801, 23
    %v803 = vor.u32 4788187, %v802
    %v804 = vand.u32 2147483647, %v803
    %v806 = vcvt.s32.f32 %v799
    %v807 = vmul.f32 %v806, %v804
    %v808 = vxor.u32 %v807, 2147483648
    %v809 = vsel %vm688, %v808, %v807
    %v810 = vsub.s32 4, %v786
    %v811 = vsel %vm688, %v810, %v786
    %v812 = vsel %vm687, %v360, %v809
    %v813 = vsel %vm687, 0, %v811
    %v814 = vmul.f32 %v812, %v812
    %v815 = vmul.f32 %v814, -0.001358992
    %v816 = vadd.f32 %v815, 0.041655596
    %v817 = vmul.f32 %v814, %v816
    %v818 = vadd.f32 %v817, -0.4999988
    %v819 = vmul.f32 %v814, %v818
    %v820 = vadd.f32 1.0, %v819
    %v821 = vmul.f32 %v812, %v812
    %v822 = vmul.f32 %v821, -0.00019511016
    %v823 = vadd.f32 %v822, 0.008332121
    %v824 = vmul.f32 %v821, %v823
    %v825 = vadd.f32 %v824, -0.16666654
    %v826 = vmul.f32 %v821, %v825
    %v827 = vadd.f32 %v826, 1.0
    %v828 = vmul.f32 %v827, %v812
    %vm829 = vweird.f32 %v360
    %v830 = vand.u32 %v813, 3
    %vm831 = vcmp.lt.s32.totalorder %v830, 2
    %vm832 = vcmp.eq.s32.totalorder %v830, 0
    %v833 = vxor.u32 %v828, 2147483648
    %v834 = vsel %vm832, %v820, %v833
    %vm835 = vcmp.eq.s32.totalorder %v830, 2
    %v836 = vxor.u32 %v820, 2147483648
    %v837 = vsel %vm835, %v836, %v828
    %v838 = vsel %vm831, %v834, %v837
    %v839 = vsel %vm829, nan, %v838
    %v840 = vand.u32 2147483647, %v364
    %vm841 = vcmp.le.f32.partialorder %v840, 0.7853982
    %vm842 = vcmp.lt.s32.totalorder %v364, 0
    %v843 = vand.u32 %v364, 2139095040
    %v844 = vshrl.u32 %v843, 23
    %v845 = vsub.s32 %v844, 127
    %v846 = vand.u32 2147483647, %v364
    %v847 = vand.u32 %v846, 8388607
    %v848 = vor.u32 %v847, 8388608
    %v849 = vsub.s32 0, %v848
    %v850 = vadd.s32 %v845, 1
    %vm851 = vcmp.gt.s32.totalorder %v850, 0
    %v852 = vsel %vm851, %v850, 0
    %v853 = vshrl.u32 %v852, 5
    %v854 = vand.u32 %v852, 31
    %v855 = vsub.s32 32, %v854
    %v856 = vshrl.u32 683565275, %v855
    %v857 = vshll.u32 683565275, %v854
    %v858 = vshrl.u32 2475754826, %v855
    %v859 = vor.u32 %v857, %v858
    %v860 = vshll.u32 2475754826, %v854
    %v861 = vshrl.u32 2131351028, %v855
    %v862 = vor.u32 %v860, %v861
    %v863 = vshll.u32 2131351028, %v854
    %v864 = vshrl.u32 2102212464, %v855
    %v865 = vor.u32 %v863, %v864
    %v866 = vshll.u32 2102212464, %v854
    %v867 = vshrl.u32 920167782, %v855
    %v868 = vor.u32 %v866, %v867
    %v869 = vshll.u32 920167782, %v854
    %v870 = vshrl.u32 1326507024, %v855
    %v871 = vor.u32 %v869, %v870
    %vm872 = vcmp.lt.s32.totalorder %v853, 1
    %vm873 = vcmp.lt.s32.totalorder %v853, 2
    %vm874 = vcmp.lt.s32.totalorder %v853, 3
    %vm875 = vcmp.lt.s32.totalorder %v853, 4
    %v876 = vsel %vm872, %v856, %v859
    %v877 = vsel %vm875, %v865, 2102212464
    %v878 = vsel %vm874, %v862, %v877
    %v879 = vsel %vm873, %v876, %v878
    %v880 = vsel %vm872, %v859, %v862
    %v881 = vsel %vm875, %v868, 920167782
    %v882 = vsel %vm874, %v865, %v881
    %v883 = vsel %vm873, %v880, %v882
    %v884 = vsel %vm872, %v862, %v865
    %v885 = vsel %vm875, %v871, 1326507024
    %v886 = vsel %vm874, %v868, %v885
    %v887 = vsel %vm873, %v884, %v886
    %v888 = vshll.u32 %v848, 8
    %v889 = vand.u32 %v888, 65535
    %v890 = vshrl.u32 %v888, 16
    %v891 = vand.u32 %v887, 65535
    %v892 = vshrl.u32 %v887, 16
    %v893 = vmul.u32 %v889, %v891
    %v894 = vmul.u32 %v889, %v892
    %v895 = vmul.u32 %v890, %v891
    %v896 = vmul.u32 %v890, %v892
    %v897 = vshll.u32 %v894, 16
    %v898 = vshrl.u32 %v894, 16
    %v899 = vshll.u32 %v895, 16
    %v900 = vshrl.u32 %v895, 16
    %vm901 = vc.u32 %v893, %v897
    %v902 = vsel %vm901, 1, 0
    %v903 = vadd.s32 %v893, %v897
    %v904 = vadd.s32 %v896, %v902
    %vm905 = vc.u32 %v903, %v899
    %v906 = vsel %vm905, 1, 0
    %v907 = vadd.s32 %v903, %v899
    %v908 = vadd.s32 %v904, %v906
    %v909 = vadd.s32 %v908, %v898
    %v910 = vadd.s32 %v909, %v900
    %v911 = vand.u32 %v888, 65535
    %v912 = vshrl.u32 %v888, 16
    %v913 = vand.u32 %v883, 65535
    %v914 = vshrl.u32 %v883, 16
    %v915 = vmul.u32 %v911, %v913
    %v916 = vmul.u32 %v911, %v914
    %v917 = vmul.u32 %v912, %v913
    %v918 = vmul.u32 %v912, %v914
    %v919 = vshll.u32 %v916, 16
    %v920 = vshrl.u32 %v916, 16
    %v921 = vshll.u32 %v917, 16
    %v922 = vshrl.u32 %v917, 16
    %vm923 = vc.u32 %v915, %v919
    %v924 = vsel %vm923, 1, 0
    %v925 = vadd.s32 %v915, %v919
    %v926 = vadd.s32 %v918, %v924
    %vm927 = vc.u32 %v925, %v921
    %v928 = vsel %vm927, 1, 0
    %v929 = vadd.s32 %v925, %v921
    %v930 = vadd.s32 %v926, %v928
    %v931 = vadd.s32 %v930, %v920
    %v932 = vadd.s32 %v931, %v922
    %v933 = vmul.u32 %v888, %v879
    %v934 = vadd.s32 %v910, %v929
    %vm935 = vc.u32 %v910, %v929
    %v936 = vadd.s32 %v932, 1
    %v937 = vsel %vm935, %v936, %v932
    %v938 = vadd.s32 %v933, %v937
    %v939 = vadd.s32 %v938, 536870912
    %v940 = vshrl.u32 %v939, 30
    %v941 = vshll.u32 %v940, 30
    %v942 = vsub.s32 %v938, %v941
    %vm943 = vcmp.lt.s32.totalorder %v942, 0
    %v944 = vsub.s32 0, %v942
    %v945 = vsel %vm943, %v944, %v942
    %v946 = vclz %v945
    %v947 = vsub.s32 %v946, 2
    %vm948 = vcmp.gt.s32.totalorder 0, %v947
    %v949 = vsel %vm948, 0, %v947
    %v950 = vsub.s32 32, %v949
    %v951 = vshll.u32 %v942, %v949
    %v952 = vshrl.u32 %v934, %v950
    %v953 = vor.u32 %v951, %v952
    %v954 = vsub.s32 4294967266, %v949
    %v955 = vadd.s32 %v954, 127
    %v956 = vshll.u32 %v955, 23
    %v957 = vor.u32 4788187, %v956
    %v958 = vand.u32 2147483647, %v957
    %v960 = vcvt.s32.f32 %v953
    %v961 = vmul.f32 %v960, %v958
    %v962 = vxor.u32 %v961, 2147483648
    %v963 = vsel %vm842, %v962, %v961
    %v964 = vsub.s32 4, %v940
    %v965 = vsel %vm842, %v964, %v940
    %v966 = vsel %vm841, %v364, %v963
    %v967 = vsel %vm841, 0, %v965
    %v968 = vmul.f32 %v966, %v966
    %v969 = vmul.f32 %v968, -0.001358992
    %v970 = vadd.f32 %v969, 0.041655596
    %v971 = vmul.f32 %v968, %v970
    %v972 = vadd.f32 %v971, -0.4999988
    %v973 = vmul.f32 %v968, %v972
    %v974 = vadd.f32 1.0, %v973
    %v975 = vmul.f32 %v966, %v966
    %v976 = vmul.f32 %v975, -0.00019511016
    %v977 = vadd.f32 %v976, 0.008332121
    %v978 = vmul.f32 %v975, %v977
    %v979 = vadd.f32 %v978, -0.16666654
    %v980 = vmul.f32 %v975, %v979
    %v981 = vadd.f32 %v980, 1.0
    %v982 = vmul.f32 %v981, %v966
    %vm983 = vweird.f32 %v364
    %v984 = vand.u32 %v967, 3
    %vm985 = vcmp.lt.s32.totalorder %v984, 2
    %vm986 = vcmp.eq.s32.totalorder %v984, 0
    %v987 = vxor.u32 %v982, 2147483648
    %v988 = vsel %vm986, %v974, %v987
    %vm989 = vcmp.eq.s32.totalorder %v984, 2
    %v990 = vxor.u32 %v974, 2147483648
    %v991 = vsel %vm989, %v990, %v982
    %v992 = vsel %vm985, %v988, %v991
    %v993 = vsel %vm983, nan, %v992
    %v994 = vand.u32 2147483647, %v368
    %vm995 = vcmp.le.f32.partialorder %v994, 0.7853982
    %vm996 = vcmp.lt.s32.totalorder %v368, 0
    %v997 = vand.u32 %v368, 2139095040
    %v998 = vshrl.u32 %v997, 23
    %v999 = vsub.s32 %v998, 127
    %v1000 = vand.u32 2147483647, %v368
    %v1001 = vand.u32 %v1000, 8388607
    %v1002 = vor.u32 %v1001, 8388608
    %v1003 = vsub.s32 0, %v1002
    %v1004 = vadd.s32 %v999, 1
    %vm1005 = vcmp.gt.s32.totalorder %v1004, 0
    %v1006 = vsel %vm1005, %v1004, 0
    %v1007 = vshrl.u32 %v1006, 5
    %v1008 = vand.u32 %v1006, 31
    %v1009 = vsub.s32 32, %v1008
    %v1010 = vshrl.u32 683565275, %v1009
    %v1011 = vshll.u32 683565275, %v1008
    %v1012 = vshrl.u32 2475754826, %v1009
    %v1013 = vor.u32 %v1011, %v1012
    %v1014 = vshll.u32 2475754826, %v1008
    %v1015 = vshrl.u32 2131351028, %v1009
    %v1016 = vor.u32 %v1014, %v1015
    %v1017 = vshll.u32 2131351028, %v1008
    %v1018 = vshrl.u32 2102212464, %v1009
    %v1019 = vor.u32 %v1017, %v1018
    %v1020 = vshll.u32 2102212464, %v1008
    %v1021 = vshrl.u32 920167782, %v1009
    %v1022 = vor.u32 %v1020, %v1021
    %v1023 = vshll.u32 920167782, %v1008
    %v1024 = vshrl.u32 1326507024, %v1009
    %v1025 = vor.u32 %v1023, %v1024
    %vm1026 = vcmp.lt.s32.totalorder %v1007, 1
    %vm1027 = vcmp.lt.s32.totalorder %v1007, 2
    %vm1028 = vcmp.lt.s32.totalorder %v1007, 3
    %vm1029 = vcmp.lt.s32.totalorder %v1007, 4
    %v1030 = vsel %vm1026, %v1010, %v1013
    %v1031 = vsel %vm1029, %v1019, 2102212464
    %v1032 = vsel %vm1028, %v1016, %v1031
    %v1033 = vsel %vm1027, %v1030, %v1032
    %v1034 = vsel %vm1026, %v1013, %v1016
    %v1035 = vsel %vm1029, %v1022, 920167782
    %v1036 = vsel %vm1028, %v1019, %v1035
    %v1037 = vsel %vm1027, %v1034, %v1036
    %v1038 = vsel %vm1026, %v1016, %v1019
    %v1039 = vsel %vm1029, %v1025, 1326507024
    %v1040 = vsel %vm1028, %v1022, %v1039
    %v1041 = vsel %vm1027, %v1038, %v1040
    %v1042 = vshll.u32 %v1002, 8
    %v1043 = vand.u32 %v1042, 65535
    %v1044 = vshrl.u32 %v1042, 16
    %v1045 = vand.u32 %v1041, 65535
    %v1046 = vshrl.u32 %v1041, 16
    %v1047 = vmul.u32 %v1043, %v1045
    %v1048 = vmul.u32 %v1043, %v1046
    %v1049 = vmul.u32 %v1044, %v1045
    %v1050 = vmul.u32 %v1044, %v1046
    %v1051 = vshll.u32 %v1048, 16
    %v1052 = vshrl.u32 %v1048, 16
    %v1053 = vshll.u32 %v1049, 16
    %v1054 = vshrl.u32 %v1049, 16
    %vm1055 = vc.u32 %v1047, %v1051
    %v1056 = vsel %vm1055, 1, 0
    %v1057 = vadd.s32 %v1047, %v1051
    %v1058 = vadd.s32 %v1050, %v1056
    %vm1059 = vc.u32 %v1057, %v1053
    %v1060 = vsel %vm1059, 1, 0
    %v1061 = vadd.s32 %v1057, %v1053
    %v1062 = vadd.s32 %v1058, %v1060
    %v1063 = vadd.s32 %v1062, %v1052
    %v1064 = vadd.s32 %v1063, %v1054
    %v1065 = vand.u32 %v1042, 65535
    %v1066 = vshrl.u32 %v1042, 16
    %v1067 = vand.u32 %v1037, 65535
    %v1068 = vshrl.u32 %v1037, 16
    %v1069 = vmul.u32 %v1065, %v1067
    %v1070 = vmul.u32 %v1065, %v1068
    %v1071 = vmul.u32 %v1066, %v1067
    %v1072 = vmul.u32 %v1066, %v1068
    %v1073 = vshll.u32 %v1070, 16
    %v1074 = vshrl.u32 %v1070, 16
    %v1075 = vshll.u32 %v1071, 16
    %v1076 = vshrl.u32 %v1071, 16
    %vm1077 = vc.u32 %v1069, %v1073
    %v1078 = vsel %vm1077, 1, 0
    %v1079 = vadd.s32 %v1069, %v1073
    %v1080 = vadd.s32 %v1072, %v1078
    %vm1081 = vc.u32 %v1079, %v1075
    %v1082 = vsel %vm1081, 1, 0
    %v1083 = vadd.s32 %v1079, %v1075
    %v1084 = vadd.s32 %v1080, %v1082
    %v1085 = vadd.s32 %v1084, %v1074
    %v1086 = vadd.s32 %v1085, %v1076
    %v1087 = vmul.u32 %v1042, %v1033
    %v1088 = vadd.s32 %v1064, %v1083
    %vm1089 = vc.u32 %v1064, %v1083
    %v1090 = vadd.s32 %v1086, 1
    %v1091 = vsel %vm1089, %v1090, %v1086
    %v1092 = vadd.s32 %v1087, %v1091
    %v1093 = vadd.s32 %v1092, 536870912
    %v1094 = vshrl.u32 %v1093, 30
    %v1095 = vshll.u32 %v1094, 30
    %v1096 = vsub.s32 %v1092, %v1095
    %vm1097 = vcmp.lt.s32.totalorder %v1096, 0
    %v1098 = vsub.s32 0, %v1096
    %v1099 = vsel %vm1097, %v1098, %v1096
    %v1100 = vclz %v1099
    %v1101 = vsub.s32 %v1100, 2
    %vm1102 = vcmp.gt.s32.totalorder 0, %v1101
    %v1103 = vsel %vm1102, 0, %v1101
    %v1104 = vsub.s32 32, %v1103
    %v1105 = vshll.u32 %v1096, %v1103
    %v1106 = vshrl.u32 %v1088, %v1104
    %v1107 = vor.u32 %v1105, %v1106
    %v1108 = vsub.s32 4294967266, %v1103
    %v1109 = vadd.s32 %v1108, 127
    %v1110 = vshll.u32 %v1109, 23
    %v1111 = vor.u32 4788187, %v1110
    %v1112 = vand.u32 2147483647, %v1111
    %v1114 = vcvt.s32.f32 %v1107
    %v1115 = vmul.f32 %v1114, %v1112
    %v1116 = vxor.u32 %v1115, 2147483648
    %v1117 = vsel %vm996, %v1116, %v1115
    %v1118 = vsub.s32 4, %v1094
    %v1119 = vsel %vm996, %v1118, %v1094
    %v1120 = vsel %vm995, %v368, %v1117
    %v1121 = vsel %vm995, 0, %v1119
    %v1122 = vmul.f32 %v1120, %v1120
    %v1123 = vmul.f32 %v1122, -0.001358992
    %v1124 = vadd.f32 %v1123, 0.041655596
    %v1125 = vmul.f32 %v1122, %v1124
    %v1126 = vadd.f32 %v1125, -0.4999988
    %v1127 = vmul.f32 %v1122, %v1126
    %v1128 = vadd.f32 1.0, %v1127
    %v1129 = vmul.f32 %v1120, %v1120
    %v1130 = vmul.f32 %v1129, -0.00019511016
    %v1131 = vadd.f32 %v1130, 0.008332121
    %v1132 = vmul.f32 %v1129, %v1131
    %v1133 = vadd.f32 %v1132, -0.16666654
    %v1134 = vmul.f32 %v1129, %v1133
    %v1135 = vadd.f32 %v1134, 1.0
    %v1136 = vmul.f32 %v1135, %v1120
    %vm1137 = vweird.f32 %v368
    %v1138 = vand.u32 %v1121, 3
    %vm1139 = vcmp.lt.s32.totalorder %v1138, 2
    %vm1140 = vcmp.eq.s32.totalorder %v1138, 0
    %v1141 = vxor.u32 %v1136, 2147483648
    %v1142 = vsel %vm1140, %v1128, %v1141
    %vm1143 = vcmp.eq.s32.totalorder %v1138, 2
    %v1144 = vxor.u32 %v1128, 2147483648
    %v1145 = vsel %vm1143, %v1144, %v1136
    %v1146 = vsel %vm1139, %v1142, %v1145
    %v1147 = vsel %vm1137, nan, %v1146
    %v1148 = vand.u32 2147483647, %v372
    %vm1149 = vcmp.le.f32.partialorder %v1148, 0.7853982
    %vm1150 = vcmp.lt.s32.totalorder %v372, 0
    %v1151 = vand.u32 %v372, 2139095040
    %v1152 = vshrl.u32 %v1151, 23
    %v1153 = vsub.s32 %v1152, 127
    %v1154 = vand.u32 2147483647, %v372
    %v1155 = vand.u32 %v1154, 8388607
    %v1156 = vor.u32 %v1155, 8388608
    %v1157 = vsub.s32 0, %v1156
    %v1158 = vadd.s32 %v1153, 1
    %vm1159 = vcmp.gt.s32.totalorder %v1158, 0
    %v1160 = vsel %vm1159, %v1158, 0
    %v1161 = vshrl.u32 %v1160, 5
    %v1162 = vand.u32 %v1160, 31
    %v1163 = vsub.s32 32, %v1162
    %v1164 = vshrl.u32 683565275, %v1163
    %v1165 = vshll.u32 683565275, %v1162
    %v1166 = vshrl.u32 2475754826, %v1163
    %v1167 = vor.u32 %v1165, %v1166
    %v1168 = vshll.u32 2475754826, %v1162
    %v1169 = vshrl.u32 2131351028, %v1163
    %v1170 = vor.u32 %v1168, %v1169
    %v1171 = vshll.u32 2131351028, %v1162
    %v1172 = vshrl.u32 2102212464, %v1163
    %v1173 = vor.u32 %v1171, %v1172
    %v1174 = vshll.u32 2102212464, %v1162
    %v1175 = vshrl.u32 920167782, %v1163
    %v1176 = vor.u32 %v1174, %v1175
    %v1177 = vshll.u32 920167782, %v1162
    %v1178 = vshrl.u32 1326507024, %v1163
    %v1179 = vor.u32 %v1177, %v1178
    %vm1180 = vcmp.lt.s32.totalorder %v1161, 1
    %vm1181 = vcmp.lt.s32.totalorder %v1161, 2
    %vm1182 = vcmp.lt.s32.totalorder %v1161, 3
    %vm1183 = vcmp.lt.s32.totalorder %v1161, 4
    %v1184 = vsel %vm1180, %v1164, %v1167
    %v1185 = vsel %vm1183, %v1173, 2102212464
    %v1186 = vsel %vm1182, %v1170, %v1185
    %v1187 = vsel %vm1181, %v1184, %v1186
    %v1188 = vsel %vm1180, %v1167, %v1170
    %v1189 = vsel %vm1183, %v1176, 920167782
    %v1190 = vsel %vm1182, %v1173, %v1189
    %v1191 = vsel %vm1181, %v1188, %v1190
    %v1192 = vsel %vm1180, %v1170, %v1173
    %v1193 = vsel %vm1183, %v1179, 1326507024
    %v1194 = vsel %vm1182, %v1176, %v1193
    %v1195 = vsel %vm1181, %v1192, %v1194
    %v1196 = vshll.u32 %v1156, 8
    %v1197 = vand.u32 %v1196, 65535
    %v1198 = vshrl.u32 %v1196, 16
    %v1199 = vand.u32 %v1195, 65535
    %v1200 = vshrl.u32 %v1195, 16
    %v1201 = vmul.u32 %v1197, %v1199
    %v1202 = vmul.u32 %v1197, %v1200
    %v1203 = vmul.u32 %v1198, %v1199
    %v1204 = vmul.u32 %v1198, %v1200
    %v1205 = vshll.u32 %v1202, 16
    %v1206 = vshrl.u32 %v1202, 16
    %v1207 = vshll.u32 %v1203, 16
    %v1208 = vshrl.u32 %v1203, 16
    %vm1209 = vc.u32 %v1201, %v1205
    %v1210 = vsel %vm1209, 1, 0
    %v1211 = vadd.s32 %v1201, %v1205
    %v1212 = vadd.s32 %v1204, %v1210
    %vm1213 = vc.u32 %v1211, %v1207
    %v1214 = vsel %vm1213, 1, 0
    %v1215 = vadd.s32 %v1211, %v1207
    %v1216 = vadd.s32 %v1212, %v1214
    %v1217 = vadd.s32 %v1216, %v1206
    %v1218 = vadd.s32 %v1217, %v1208
    %v1219 = vand.u32 %v1196, 65535
    %v1220 = vshrl.u32 %v1196, 16
    %v1221 = vand.u32 %v1191, 65535
    %v1222 = vshrl.u32 %v1191, 16
    %v1223 = vmul.u32 %v1219, %v1221
    %v1224 = vmul.u32 %v1219, %v1222
    %v1225 = vmul.u32 %v1220, %v1221
    %v1226 = vmul.u32 %v1220, %v1222
    %v1227 = vshll.u32 %v1224, 16
    %v1228 = vshrl.u32 %v1224, 16
    %v1229 = vshll.u32 %v1225, 16
    %v1230 = vshrl.u32 %v1225, 16
    %vm1231 = vc.u32 %v1223, %v1227
    %v1232 = vsel %vm1231, 1, 0
    %v1233 = vadd.s32 %v1223, %v1227
    %v1234 = vadd.s32 %v1226, %v1232
    %vm1235 = vc.u32 %v1233, %v1229
    %v1236 = vsel %vm1235, 1, 0
    %v1237 = vadd.s32 %v1233, %v1229
    %v1238 = vadd.s32 %v1234, %v1236
    %v1239 = vadd.s32 %v1238, %v1228
    %v1240 = vadd.s32 %v1239, %v1230
    %v1241 = vmul.u32 %v1196, %v1187
    %v1242 = vadd.s32 %v1218, %v1237
    %vm1243 = vc.u32 %v1218, %v1237
    %v1244 = vadd.s32 %v1240, 1
    %v1245 = vsel %vm1243, %v1244, %v1240
    %v1246 = vadd.s32 %v1241, %v1245
    %v1247 = vadd.s32 %v1246, 536870912
    %v1248 = vshrl.u32 %v1247, 30
    %v1249 = vshll.u32 %v1248, 30
    %v1250 = vsub.s32 %v1246, %v1249
    %vm1251 = vcmp.lt.s32.totalorder %v1250, 0
    %v1252 = vsub.s32 0, %v1250
    %v1253 = vsel %vm1251, %v1252, %v1250
    %v1254 = vclz %v1253
    %v1255 = vsub.s32 %v1254, 2
    %vm1256 = vcmp.gt.s32.totalorder 0, %v1255
    %v1257 = vsel %vm1256, 0, %v1255
    %v1258 = vsub.s32 32, %v1257
    %v1259 = vshll.u32 %v1250, %v1257
    %v1260 = vshrl.u32 %v1242, %v1258
    %v1261 = vor.u32 %v1259, %v1260
    %v1262 = vsub.s32 4294967266, %v1257
    %v1263 = vadd.s32 %v1262, 127
    %v1264 = vshll.u32 %v1263, 23
    %v1265 = vor.u32 4788187, %v1264
    %v1266 = vand.u32 2147483647, %v1265
    %v1268 = vcvt.s32.f32 %v1261
    %v1269 = vmul.f32 %v1268, %v1266
    %v1270 = vxor.u32 %v1269, 2147483648
    %v1271 = vsel %vm1150, %v1270, %v1269
    %v1272 = vsub.s32 4, %v1248
    %v1273 = vsel %vm1150, %v1272, %v1248
    %v1274 = vsel %vm1149, %v372, %v1271
    %v1275 = vsel %vm1149, 0, %v1273
    %v1276 = vmul.f32 %v1274, %v1274
    %v1277 = vmul.f32 %v1276, -0.001358992
    %v1278 = vadd.f32 %v1277, 0.041655596
    %v1279 = vmul.f32 %v1276, %v1278
    %v1280 = vadd.f32 %v1279, -0.4999988
    %v1281 = vmul.f32 %v1276, %v1280
    %v1282 = vadd.f32 1.0, %v1281
    %v1283 = vmul.f32 %v1274, %v1274
    %v1284 = vmul.f32 %v1283, -0.00019511016
    %v1285 = vadd.f32 %v1284, 0.008332121
    %v1286 = vmul.f32 %v1283, %v1285
    %v1287 = vadd.f32 %v1286, -0.16666654
    %v1288 = vmul.f32 %v1283, %v1287
    %v1289 = vadd.f32 %v1288, 1.0
    %v1290 = vmul.f32 %v1289, %v1274
    %vm1291 = vweird.f32 %v372
    %v1292 = vand.u32 %v1275, 3
    %vm1293 = vcmp.lt.s32.totalorder %v1292, 2
    %vm1294 = vcmp.eq.s32.totalorder %v1292, 0
    %v1295 = vxor.u32 %v1290, 2147483648
    %v1296 = vsel %vm1294, %v1282, %v1295
    %vm1297 = vcmp.eq.s32.totalorder %v1292, 2
    %v1298 = vxor.u32 %v1282, 2147483648
    %v1299 = vsel %vm1297, %v1298, %v1290
    %v1300 = vsel %vm1293, %v1296, %v1299
    %v1301 = vsel %vm1291, nan, %v1300
    %v1302 = vand.u32 2147483647, %v376
    %vm1303 = vcmp.le.f32.partialorder %v1302, 0.7853982
    %vm1304 = vcmp.lt.s32.totalorder %v376, 0
    %v1305 = vand.u32 %v376, 2139095040
    %v1306 = vshrl.u32 %v1305, 23
    %v1307 = vsub.s32 %v1306, 127
    %v1308 = vand.u32 2147483647, %v376
    %v1309 = vand.u32 %v1308, 8388607
    %v1310 = vor.u32 %v1309, 8388608
    %v1311 = vsub.s32 0, %v1310
    %v1312 = vadd.s32 %v1307, 1
    %vm1313 = vcmp.gt.s32.totalorder %v1312, 0
    %v1314 = vsel %vm1313, %v1312, 0
    %v1315 = vshrl.u32 %v1314, 5
    %v1316 = vand.u32 %v1314, 31
    %v1317 = vsub.s32 32, %v1316
    %v1318 = vshrl.u32 683565275, %v1317
    %v1319 = vshll.u32 683565275, %v1316
    %v1320 = vshrl.u32 2475754826, %v1317
    %v1321 = vor.u32 %v1319, %v1320
    %v1322 = vshll.u32 2475754826, %v1316
    %v1323 = vshrl.u32 2131351028, %v1317
    %v1324 = vor.u32 %v1322, %v1323
    %v1325 = vshll.u32 2131351028, %v1316
    %v1326 = vshrl.u32 2102212464, %v1317
    %v1327 = vor.u32 %v1325, %v1326
    %v1328 = vshll.u32 2102212464, %v1316
    %v1329 = vshrl.u32 920167782, %v1317
    %v1330 = vor.u32 %v1328, %v1329
    %v1331 = vshll.u32 920167782, %v1316
    %v1332 = vshrl.u32 1326507024, %v1317
    %v1333 = vor.u32 %v1331, %v1332
    %vm1334 = vcmp.lt.s32.totalorder %v1315, 1
    %vm1335 = vcmp.lt.s32.totalorder %v1315, 2
    %vm1336 = vcmp.lt.s32.totalorder %v1315, 3
    %vm1337 = vcmp.lt.s32.totalorder %v1315, 4
    %v1338 = vsel %vm1334, %v1318, %v1321
    %v1339 = vsel %vm1337, %v1327, 2102212464
    %v1340 = vsel %vm1336, %v1324, %v1339
    %v1341 = vsel %vm1335, %v1338, %v1340
    %v1342 = vsel %vm1334, %v1321, %v1324
    %v1343 = vsel %vm1337, %v1330, 920167782
    %v1344 = vsel %vm1336, %v1327, %v1343
    %v1345 = vsel %vm1335, %v1342, %v1344
    %v1346 = vsel %vm1334, %v1324, %v1327
    %v1347 = vsel %vm1337, %v1333, 1326507024
    %v1348 = vsel %vm1336, %v1330, %v1347
    %v1349 = vsel %vm1335, %v1346, %v1348
    %v1350 = vshll.u32 %v1310, 8
    %v1351 = vand.u32 %v1350, 65535
    %v1352 = vshrl.u32 %v1350, 16
    %v1353 = vand.u32 %v1349, 65535
    %v1354 = vshrl.u32 %v1349, 16
    %v1355 = vmul.u32 %v1351, %v1353
    %v1356 = vmul.u32 %v1351, %v1354
    %v1357 = vmul.u32 %v1352, %v1353
    %v1358 = vmul.u32 %v1352, %v1354
    %v1359 = vshll.u32 %v1356, 16
    %v1360 = vshrl.u32 %v1356, 16
    %v1361 = vshll.u32 %v1357, 16
    %v1362 = vshrl.u32 %v1357, 16
    %vm1363 = vc.u32 %v1355, %v1359
    %v1364 = vsel %vm1363, 1, 0
    %v1365 = vadd.s32 %v1355, %v1359
    %v1366 = vadd.s32 %v1358, %v1364
    %vm1367 = vc.u32 %v1365, %v1361
    %v1368 = vsel %vm1367, 1, 0
    %v1369 = vadd.s32 %v1365, %v1361
    %v1370 = vadd.s32 %v1366, %v1368
    %v1371 = vadd.s32 %v1370, %v1360
    %v1372 = vadd.s32 %v1371, %v1362
    %v1373 = vand.u32 %v1350, 65535
    %v1374 = vshrl.u32 %v1350, 16
    %v1375 = vand.u32 %v1345, 65535
    %v1376 = vshrl.u32 %v1345, 16
    %v1377 = vmul.u32 %v1373, %v1375
    %v1378 = vmul.u32 %v1373, %v1376
    %v1379 = vmul.u32 %v1374, %v1375
    %v1380 = vmul.u32 %v1374, %v1376
    %v1381 = vshll.u32 %v1378, 16
    %v1382 = vshrl.u32 %v1378, 16
    %v1383 = vshll.u32 %v1379, 16
    %v1384 = vshrl.u32 %v1379, 16
    %vm1385 = vc.u32 %v1377, %v1381
    %v1386 = vsel %vm1385, 1, 0
    %v1387 = vadd.s32 %v1377, %v1381
    %v1388 = vadd.s32 %v1380, %v1386
    %vm1389 = vc.u32 %v1387, %v1383
    %v1390 = vsel %vm1389, 1, 0
    %v1391 = vadd.s32 %v1387, %v1383
    %v1392 = vadd.s32 %v1388, %v1390
    %v1393 = vadd.s32 %v1392, %v1382
    %v1394 = vadd.s32 %v1393, %v1384
    %v1395 = vmul.u32 %v1350, %v1341
    %v1396 = vadd.s32 %v1372, %v1391
    %vm1397 = vc.u32 %v1372, %v1391
    %v1398 = vadd.s32 %v1394, 1
    %v1399 = vsel %vm1397, %v1398, %v1394
    %v1400 = vadd.s32 %v1395, %v1399
    %v1401 = vadd.s32 %v1400, 536870912
    %v1402 = vshrl.u32 %v1401, 30
    %v1403 = vshll.u32 %v1402, 30
    %v1404 = vsub.s32 %v1400, %v1403
    %vm1405 = vcmp.lt.s32.totalorder %v1404, 0
    %v1406 = vsub.s32 0, %v1404
    %v1407 = vsel %vm1405, %v1406, %v1404
    %v1408 = vclz %v1407
    %v1409 = vsub.s32 %v1408, 2
    %vm1410 = vcmp.gt.s32.totalorder 0, %v1409
    %v1411 = vsel %vm1410, 0, %v1409
    %v1412 = vsub.s32 32, %v1411
    %v1413 = vshll.u32 %v1404, %v1411
    %v1414 = vshrl.u32 %v1396, %v1412
    %v1415 = vor.u32 %v1413, %v1414
    %v1416 = vsub.s32 4294967266, %v1411
    %v1417 = vadd.s32 %v1416, 127
    %v1418 = vshll.u32 %v1417, 23
    %v1419 = vor.u32 4788187, %v1418
    %v1420 = vand.u32 2147483647, %v1419
    %v1422 = vcvt.s32.f32 %v1415
    %v1423 = vmul.f32 %v1422, %v1420
    %v1424 = vxor.u32 %v1423, 2147483648
    %v1425 = vsel %vm1304, %v1424, %v1423
    %v1426 = vsub.s32 4, %v1402
    %v1427 = vsel %vm1304, %v1426, %v1402
    %v1428 = vsel %vm1303, %v376, %v1425
    %v1429 = vsel %vm1303, 0, %v1427
    %v1430 = vmul.f32 %v1428, %v1428
    %v1431 = vmul.f32 %v1430, -0.001358992
    %v1432 = vadd.f32 %v1431, 0.041655596
    %v1433 = vmul.f32 %v1430, %v1432
    %v1434 = vadd.f32 %v1433, -0.4999988
    %v1435 = vmul.f32 %v1430, %v1434
    %v1436 = vadd.f32 1.0, %v1435
    %v1437 = vmul.f32 %v1428, %v1428
    %v1438 = vmul.f32 %v1437, -0.00019511016
    %v1439 = vadd.f32 %v1438, 0.008332121
    %v1440 = vmul.f32 %v1437, %v1439
    %v1441 = vadd.f32 %v1440, -0.16666654
    %v1442 = vmul.f32 %v1437, %v1441
    %v1443 = vadd.f32 %v1442, 1.0
    %v1444 = vmul.f32 %v1443, %v1428
    %vm1445 = vweird.f32 %v376
    %v1446 = vand.u32 %v1429, 3
    %vm1447 = vcmp.lt.s32.totalorder %v1446, 2
    %vm1448 = vcmp.eq.s32.totalorder %v1446, 0
    %v1449 = vxor.u32 %v1444, 2147483648
    %v1450 = vsel %vm1448, %v1436, %v1449
    %vm1451 = vcmp.eq.s32.totalorder %v1446, 2
    %v1452 = vxor.u32 %v1436, 2147483648
    %v1453 = vsel %vm1451, %v1452, %v1444
    %v1454 = vsel %vm1447, %v1450, %v1453
    %v1455 = vsel %vm1445, nan, %v1454
    %1456 = vst [vmem:[#allocation2] sm:$0xff] %v531
    %1457 = vst [vmem:[#allocation2 + $0x8] sm:$0xff] %v685
    %1458 = vst [vmem:[#allocation2 + $0x10] sm:$0xff] %v839
    %1459 = vst [vmem:[#allocation2 + $0x18] sm:$0xff] %v993
    %1460 = vst [vmem:[#allocation2 + $0x20] sm:$0xff] %v1147
    %1461 = vst [vmem:[#allocation2 + $0x28] sm:$0xff] %v1301
    %1462 = vst [vmem:[#allocation2 + $0x30] sm:$0xff] %v1455
    // Predicated region
    $region10: #{tpu_custom_call.1} parent=1 // pred_check
      _
    $region11: #{tpu_custom_call.1} parent=1 // pred_check_branch
      %1464 = sbr.rel (0) target = $region13
    $region12: #{tpu_custom_call.1} parent=1 // pred_region
      %1466 = vsyncadd [#allocation3], 0
      %s1467 = sshll.u32 [#allocation2], 4
      %s1468 = int_to_ptr.vmem [resolvable:$true] %s1467
      %s1469 = sshll.u32 %s2, 4
      %s1470 = int_to_ptr.hbm [resolvable:$true] %s1469
      %1475 = dma.vmem_to_hbm [thread:$0]  %s1468, 896, %s1470, [#allocation3], 128, 128, 8
    $region13: #{tpu_custom_call.1} parent=1 // pred_fallthru
      _
    // Predicated region
    $region14: #{tpu_custom_call.1} parent=1 // pred_check
      _
    $region15: #{tpu_custom_call.1} parent=1 // pred_check_branch
      %1477 = sbr.rel (0) target = $region17
    $region16: #{tpu_custom_call.1} parent=1 // pred_region
      %1479 = dma.done [#allocation3], 896
    $region17: #{tpu_custom_call.1} parent=1 // pred_fallthru
      _
    %1480 = vsyncpa [#allocation3], 1

</llo_original>
